<compile_context>
chip_gen: v5e
topology: v5e:2x2
jax: 0.10.0
libtpu: 0.0.40
codegen_flags: <defaults>
</compile_context>

<pallas_src>
import functools

import jax
import jax.numpy as jnp
from jax import lax
from jax.experimental import pallas as pl
from jax.experimental.pallas import tpu as pltpu


_MAX_CHUNK = 512   # d_inner lanes processed per chunk of the first GEMM


def _pick_chunk(d_inner):
    """Largest convenient chunk of d_inner keeping the live [T, chunk] f32 act small."""
    if d_inner <= _MAX_CHUNK:
        return d_inner
    for c in (512, 384, 256, 128):
        if d_inner % c == 0:
            return c
    return d_inner  # TODO(synk): ragged d_inner chunking (rare; single-chunk fallback)


def _vmem_capacity_bytes():
    """Physical VMEM per TensorCore; conservative (v7x) fallback off-TPU/in interpret."""
    try:
        cap = int(getattr(pltpu.get_tpu_info(), "vmem_capacity_bytes", 0))
        if cap > 0:
            return cap
    except Exception:
        pass
    return 64 * 1024 * 1024


def _round_up8(n):
    return ((n + 7) // 8) * 8


def _activation(h, activation, gelu_approximate):
    if activation == "relu":
        return jnp.maximum(h, 0.0)
    # tanh-GELU keeps the transcendental on the (otherwise idle) EUP slot instead of a
    # long erf VALU polynomial over [T, chunk] (perf review); gelu_approximate=False
    # restores the torch.nn.GELU() exact-erf default.
    return jax.nn.gelu(h, approximate=gelu_approximate)


def _resident_spec(block_shape):
    """Constant-index (grid-invariant) block: single-buffer it — double-buffering a
    block that never changes is pure VMEM waste (perf review)."""
    idx_map = lambda i: (0,) * len(block_shape)
    try:
        return pl.BlockSpec(block_shape, idx_map, pipeline_mode=pl.Buffered(1))
    except Exception:  # pragma: no cover - jax versions without pipeline_mode/Buffered
        return pl.BlockSpec(block_shape, idx_map)


def _logistic_noise(seed, n_rows):
    """Logistic(0,1) noise for the RelaxedBernoulli reparameterized sample."""
    return jax.random.logistic(jax.random.PRNGKey(seed), (n_rows, 1), jnp.float32)


# --------------------------------------------------------------------------- kernels


def _mlp_logits(x_ref, w1_ref, b1_ref, w2_ref, b2_ref, *, activation, gelu_approximate):
    """Linear(d_model,d_inner) -> act -> Linear(d_inner,1) for one row tile.

    First Linear on the MXU (bf16 inputs, f32 accumulation), chunked over d_inner;
    second Linear as a VPU multiply with the w2 row + XLU lane reduction (a 1-wide
    MXU matmul would waste the systolic array).  Returns [T, 1] f32 logits.
    """
    x = x_ref[...]                               # [T, D] in the matmul dtype (bf16)
    tile_n = x.shape[0]
    n_chunks = w1_ref.shape[0]

    def chunk_step(c, logits):
        # w1_ref[c]: [D, chunk] — dynamic index on an *untiled leading* axis only.
        h = jnp.dot(x, w1_ref[c], preferred_element_type=jnp.float32)   # [T, chunk]
        h = _activation(h + b1_ref[c], activation, gelu_approximate)    # f32 epilogue
        return logits + jnp.sum(h * w2_ref[c], axis=-1, keepdims=True)

    logits0 = jnp.zeros((tile_n, 1), jnp.float32)
    if n_chunks == 1:
        logits = chunk_step(0, logits0)
    else:
        # fori_loop (not a static Python unroll) bounds each h chunk's live range.
        logits = lax.fori_loop(0, n_chunks, chunk_step, logits0, unroll=True)
    return logits + b2_ref[0]                    # b2 scalar from SMEM


def _bp_kernel_entropy(x_ref, w1_ref, b1_ref, w2_ref, b2_ref, soft_ref, *,
                       activation, gelu_approximate):
    logits = _mlp_logits(x_ref, w1_ref, b1_ref, w2_ref, b2_ref,
                         activation=activation, gelu_approximate=gelu_approximate)
    soft_ref[...] = jax.nn.sigmoid(logits)


def _bp_kernel_gumbel(x_ref, w1_ref, b1_ref, w2_ref, b2_ref, noise_ref, soft_ref, *,
                      activation, gelu_approximate, temp):
    logits = _mlp_logits(x_ref, w1_ref, b1_ref, w2_ref, b2_ref,
                         activation=activation, gelu_approximate=gelu_approximate)
    # RelaxedBernoulli(temperature=temp, probs=sigmoid(logits)).rsample()
    #   == sigmoid((logits + logistic_noise) / temp)
    soft_ref[...] = jax.nn.sigmoid((logits + noise_ref[...]) / temp)


# --------------------------------------------------------------------------- wrapper


class BoundaryPredictor:
    """JAX/Pallas port of the PyTorch BoundaryPredictor forward pass."""

    def __init__(self, d_model, d_inner, activation_function, temp, prior, bp_type,
                 threshold=0.5, gelu_approximate=True, use_bf16_matmul=True, key=None):
        assert activation_function in ("relu", "gelu")
        self.d_model = d_model
        self.d_inner = d_inner
        self.activation_function = activation_function
        self.gelu_approximate = gelu_approximate
        self.temp = temp
        self.prior = prior
        self.bp_type = bp_type
        self.threshold = threshold
        self._mm_dtype = jnp.bfloat16 if use_bf16_matmul else jnp.float32

        if key is None:
            key = jax.random.PRNGKey(0)
        k1, k2, k3, k4 = jax.random.split(key, 4)
        # nn.Linear-style uniform(-1/sqrt(fan_in), +1/sqrt(fan_in)) init (f32 masters).
        bound1 = 1.0 / (d_model ** 0.5)
        self.w1 = jax.random.uniform(k1, (d_model, d_inner), jnp.float32, -bound1, bound1)
        self.b1 = jax.random.uniform(k2, (d_inner,), jnp.float32, -bound1, bound1)
        bound2 = 1.0 / (d_inner ** 0.5)
        self.w2 = jax.random.uniform(k3, (d_inner,), jnp.float32, -bound2, bound2)
        self.b2 = jax.random.uniform(k4, (1,), jnp.float32, -bound2, bound2)

        # Kernel-layout copies (precomputed once):
        #   w1: [n_chunks, d_model, chunk] in the matmul dtype (bf16 MXU feed); the
        #       chunk axis is leading & untiled so the fori_loop indexes it cheaply.
        #   b1/w2: [n_chunks, 1, chunk] f32 lane-dense rows (epilogue stays f32, which
        #       also avoids bf16 VPU/EUP paths that v5e lacks).
        self._chunk = _pick_chunk(d_inner)
        self._n_chunks = d_inner // self._chunk
        assert self._n_chunks * self._chunk == d_inner
        self._w1_k = (self.w1.astype(self._mm_dtype)
                      .reshape(d_model, self._n_chunks, self._chunk)
                      .transpose(1, 0, 2))
        self._b1_k = self.b1.reshape(self._n_chunks, 1, self._chunk)
        self._w2_k = self.w2.reshape(self._n_chunks, 1, self._chunk)

    # ---- VMEM / tiling plan -------------------------------------------------------

    def _vmem_need_bytes(self, tile, gumbel):
        itm = jnp.dtype(self._mm_dtype).itemsize
        need = 2 * tile * self.d_model * itm          # x tile, double-buffered
        need += self.d_model * self.d_inner * itm     # w1 resident, Buffered(1)
        need += 2 * self.d_inner * 4                  # b1 + w2 rows, Buffered(1)
        need += 2 * tile * self._chunk * 4            # live [T, chunk] f32 h temps
        need += 2 * tile * 4                          # soft output, double-buffered
        if gumbel:
            need += 2 * tile * 4                      # logistic-noise input
        need += 16 * tile * 4 + (2 << 20)             # logits/misc + internal scratch
        return need

    def _plan(self, n_rows, gumbel):
        cap = _vmem_capacity_bytes()
        max_rows = 1024 if cap >= (96 << 20) else 512   # v5e/v6e: 128 MiB; v7x: 64 MiB
        tile = min(max_rows, n_rows)
        if tile < n_rows:
            tile = max(8, tile - tile % 8)              # interior tiles: multiple of 8
        elif n_rows > 8:
            # Keep >=2 row tiles so the 2nd TensorCore on v7x gets work even for short
            # sequences (grid axis is dimension_semantics=("parallel",)).
            half = _round_up8((n_rows + 1) // 2)
            if half < n_rows:
                tile = half
        budget = cap - (8 << 20)                        # ~8 MiB compiler headroom
        while tile > 8 and self._vmem_need_bytes(tile, gumbel) > budget:
            tile = max(8, _round_up8(tile // 2))
        # TODO(synk): stream w1 per d_inner chunk (2-D grid, BlockSpec (d_model, chunk))
        # when resident w1 alone exceeds the budget (very large d_model*d_inner).
        need = self._vmem_need_bytes(tile, gumbel)
        vmem_limit = int(min(budget, max(need + (need >> 1) + (4 << 20), 32 << 20)))
        return tile, vmem_limit

    # ---- forward -------------------------------------------------------------------

    def __call__(self, hidden, seed=0):
        # hidden: [seq_len, batch, d_model]
        S, B, D = hidden.shape
        assert D == self.d_model
        N = S * B
        gumbel = self.bp_type == "gumbel"
        if not gumbel and self.bp_type not in ("entropy", "unigram"):
            raise ValueError(f"unknown bp_type {self.bp_type}")

        x = hidden.reshape(N, D).astype(self._mm_dtype)  # bf16 feed for the MXU

        tile_n, vmem_limit = self._plan(N, gumbel)
        grid = (pl.cdiv(N, tile_n),)
        # NOTE: the last row tile may be ragged; the kernel computes on padded rows
        # whose results are masked out of the output DMA — do not "optimize" that away.

        x_spec = pl.BlockSpec((tile_n, D), lambda i: (i, 0))
        w1_spec = _resident_spec((self._n_chunks, D, self._chunk))
        row_spec = _resident_spec((self._n_chunks, 1, self._chunk))
        smem_spec = pl.BlockSpec(memory_space=pltpu.MemorySpace.SMEM)
        col_spec = pl.BlockSpec((tile_n, 1), lambda i: (i, 0))
        # TODO(synk): lane-dense soft output ((num_tiles, tile_n) blocks + in-kernel
        # relayout) — output bytes are <1% of x traffic here, so deferred.
        out_shape = jax.ShapeDtypeStruct((N, 1), jnp.float32)

        compiler_params = pltpu.CompilerParams(
            dimension_semantics=("parallel",),    # shard row tiles across v7x's 2 TCs
            vmem_limit_bytes=vmem_limit)

        if gumbel:
            # Noise generated host-side with jax.random (pltpu PRNG primitives have no
            # CPU/interpret lowering); its [N,1] DMA is negligible.
            noise = _logistic_noise(seed, N)
            kernel = functools.partial(
                _bp_kernel_gumbel, activation=self.activation_function,
                gelu_approximate=self.gelu_approximate, temp=float(self.temp))
            soft = pl.pallas_call(
                kernel, grid=grid,
                in_specs=[x_spec, w1_spec, row_spec, row_spec, smem_spec, col_spec],
                out_specs=col_spec, out_shape=out_shape,
                compiler_params=compiler_params,
            )(x, self._w1_k, self._b1_k, self._w2_k, self.b2, noise)
        else:
            kernel = functools.partial(
                _bp_kernel_entropy, activation=self.activation_function,
                gelu_approximate=self.gelu_approximate)
            soft = pl.pallas_call(
                kernel, grid=grid,
                in_specs=[x_spec, w1_spec, row_spec, row_spec, smem_spec],
                out_specs=col_spec, out_shape=out_shape,
                compiler_params=compiler_params,
            )(x, self._w1_k, self._b1_k, self._w2_k, self.b2)

        # squeeze(-1).transpose(0, 1): [seq, batch] -> [batch, seq]
        soft = soft.reshape(S, B).transpose(1, 0)
        # Straight-through hard boundaries: forward value is the threshold test.
        # Computed in the wrapper so it fuses with the reshape/transpose and the kernel
        # keeps a single lane-sparse output (perf review).
        hard = (soft > self.threshold).astype(jnp.float32)
        return soft, hard

    # TODO(synk): calc_loss (BCEWithLogitsLoss / Binomial log-prob) and calc_stats are
    # host-side training/eval utilities, not part of the forward hot path; omitted.


# --------------------------------------------------------------------------- tests


def _reference_soft(bp, hidden, seed=0):
    """Pure-JAX reference matching the kernel's numerics (bf16 GEMM inputs, f32 rest)."""
    S, B, D = hidden.shape
    x = hidden.reshape(S * B, D).astype(bp._mm_dtype).astype(jnp.float32)
    w1 = bp.w1.astype(bp._mm_dtype).astype(jnp.float32)
    h = x @ w1 + bp.b1
    h = _activation(h, bp.activation_function, bp.gelu_approximate)
    logits = h @ bp.w2 + bp.b2[0]
    if bp.bp_type == "gumbel":
        logits = (logits + _logistic_noise(seed, S * B)[:, 0]) / bp.temp
    return jax.nn.sigmoid(logits).reshape(S, B).transpose(1, 0)


def _reference_soft_f32(bp, hidden):
    """Full-f32 / exact-erf reference (literal torch semantics) for a loose check."""
    S, B, D = hidden.shape
    x = hidden.reshape(S * B, D).astype(jnp.float32)
    h = x @ bp.w1 + bp.b1
    if bp.activation_function == "relu":
        h = jnp.maximum(h, 0.0)
    else:
        h = jax.nn.gelu(h, approximate=False)
    logits = h @ bp.w2 + bp.b2[0]
    return jax.nn.sigmoid(logits).reshape(S, B).transpose(1, 0)


if __name__ == "__main__":
    key = jax.random.PRNGKey(0)
    k_param, k_h1, k_h2 = jax.random.split(key, 3)

    # --- config A: entropy / gelu, N=16 -> two 8-row tiles (megacore split) ---------
    bp_a = BoundaryPredictor(32, 64, "gelu", temp=0.5, prior=0.2,
                             bp_type="entropy", threshold=0.5, key=k_param)
    hid_a = jax.random.normal(k_h1, (8, 2, 32), dtype=jnp.float32)
    soft_a, hard_a = jax.block_until_ready(bp_a(hid_a))
    assert soft_a.shape == (2, 8) and hard_a.shape == (2, 8)
    assert jnp.allclose(soft_a, _reference_soft(bp_a, hid_a), atol=1e-4, rtol=1e-4)
    # Loose check vs the full-f32 / exact-erf torch semantics: documents the
    # intentional bf16-GEMM + tanh-GELU precision tradeoff.
    assert jnp.allclose(soft_a, _reference_soft_f32(bp_a, hid_a), atol=5e-2)
    assert jnp.array_equal(hard_a, (soft_a > bp_a.threshold).astype(jnp.float32))

    # --- config B: entropy / relu, d_inner=1024 -> 2 chunks (fori_loop),
    #               N=1000 -> ragged last row tile ----------------------------------
    bp_b = BoundaryPredictor(128, 1024, "relu", temp=0.5, prior=0.2,
                             bp_type="entropy", threshold=0.5, key=k_param)
    hid_b = jax.random.normal(k_h2, (250, 4, 128), dtype=jnp.float32)
    soft_b, hard_b = jax.block_until_ready(bp_b(hid_b))
    assert soft_b.shape == (4, 250) and hard_b.shape == (4, 250)
    assert jnp.allclose(soft_b, _reference_soft(bp_b, hid_b), atol=1e-4, rtol=1e-4)
    assert jnp.array_equal(hard_b, (soft_b > bp_b.threshold).astype(jnp.float32))

    # --- config C: gumbel path, wrapper-generated logistic noise (exact reference) --
    bp_c = BoundaryPredictor(32, 64, "relu", temp=0.5, prior=0.2,
                             bp_type="gumbel", threshold=0.5, key=k_param)
    soft_c, hard_c = jax.block_until_ready(bp_c(hid_a, seed=123))
    assert soft_c.shape == (2, 8) and hard_c.shape == (2, 8)
    assert jnp.allclose(soft_c, _reference_soft(bp_c, hid_a, seed=123),
                        atol=1e-4, rtol=1e-4)
    assert jnp.all((soft_c >= 0.0) & (soft_c <= 1.0))
    assert jnp.array_equal(hard_c, (soft_c > bp_c.threshold).astype(jnp.float32))

    print("KERNEL_OK")
</pallas_src>

<mosaic_0001>
module attributes {stable_mosaic.version = 11 : i64} {
  func.func @_bp_kernel_entropy(%arg0: i32, %arg1: memref<8x32xbf16, #tpu.memory_space<vmem>>, %arg2: memref<1x32x64xbf16, #tpu.memory_space<vmem>>, %arg3: memref<1x1x64xf32, #tpu.memory_space<vmem>>, %arg4: memref<1x1x64xf32, #tpu.memory_space<vmem>>, %arg5: memref<1xf32, #tpu.memory_space<smem>>, %arg6: memref<8x1xf32, #tpu.memory_space<vmem>>) attributes {dimension_semantics = [#tpu.dimension_semantics<parallel>], iteration_bounds = array<i64: 2>, scalar_prefetch = 0 : i64, scratch_operands = 0 : i64, tpu.core_type = #tpu.core_type<tc>, window_params = [{transform_indices = @transform_0, window_bounds = array<i64: 8, 32>}, {pipeline_mode = #tpu.pipeline_mode<synchronous>, transform_indices = @transform_1, window_bounds = array<i64: 1, 32, 64>}, {pipeline_mode = #tpu.pipeline_mode<synchronous>, transform_indices = @transform_2, window_bounds = array<i64: 1, 1, 64>}, {pipeline_mode = #tpu.pipeline_mode<synchronous>, transform_indices = @transform_3, window_bounds = array<i64: 1, 1, 64>}, {transform_indices = @transform_4, window_bounds = array<i64: 1>}, {transform_indices = @transform_5, window_bounds = array<i64: 8, 1>}]} {
    %c0 = arith.constant 0 : index
    %c0_0 = arith.constant 0 : index
    %0 = vector.load %arg1[%c0, %c0_0] : memref<8x32xbf16, #tpu.memory_space<vmem>>, vector<8x32xbf16>
    %cst = arith.constant 0.000000e+00 : f32
    %1 = vector.broadcast %cst : f32 to vector<8x1xf32>
    %c0_1 = arith.constant 0 : index
    %c0_2 = arith.constant 0 : index
    %c0_3 = arith.constant 0 : index
    %2 = vector.load %arg2[%c0_1, %c0_2, %c0_3] : memref<1x32x64xbf16, #tpu.memory_space<vmem>>, vector<1x32x64xbf16>
    %3 = vector.shape_cast %2 : vector<1x32x64xbf16> to vector<32x64xbf16>
    %cst_4 = arith.constant dense<0.000000e+00> : vector<8x64xf32>
    %4 = tpu.matmul %0, %3, %cst_4 {dimension_numbers = #tpu.dot_dimension_numbers<[1], [0], [0], [1], [0, 0, 1, 1], [], []>} : vector<8x32xbf16>, vector<32x64xbf16>, vector<8x64xf32> -> vector<8x64xf32>
    %c0_5 = arith.constant 0 : index
    %c0_6 = arith.constant 0 : index
    %c0_7 = arith.constant 0 : index
    %5 = vector.load %arg3[%c0_5, %c0_6, %c0_7] : memref<1x1x64xf32, #tpu.memory_space<vmem>>, vector<1x1x64xf32>
    %6 = vector.shape_cast %5 : vector<1x1x64xf32> to vector<1x64xf32>
    %7 = vector.broadcast %6 : vector<1x64xf32> to vector<8x64xf32>
    %8 = arith.addf %4, %7 : vector<8x64xf32>
    %9 = arith.mulf %8, %8 : vector<8x64xf32>
    %10 = arith.mulf %8, %9 : vector<8x64xf32>
    %cst_8 = arith.constant 4.471500e-02 : f32
    %11 = vector.broadcast %cst_8 : f32 to vector<8x64xf32>
    %12 = arith.mulf %11, %10 : vector<8x64xf32>
    %13 = arith.addf %8, %12 : vector<8x64xf32>
    %cst_9 = arith.constant 0.797884583 : f32
    %14 = vector.broadcast %cst_9 : f32 to vector<8x64xf32>
    %15 = arith.mulf %14, %13 : vector<8x64xf32>
    %16 = math.tanh %15 : vector<8x64xf32>
    %cst_10 = arith.constant 1.000000e+00 : f32
    %17 = vector.broadcast %cst_10 : f32 to vector<8x64xf32>
    %18 = arith.addf %17, %16 : vector<8x64xf32>
    %cst_11 = arith.constant 5.000000e-01 : f32
    %19 = vector.broadcast %cst_11 : f32 to vector<8x64xf32>
    %20 = arith.mulf %19, %18 : vector<8x64xf32>
    %21 = arith.mulf %8, %20 : vector<8x64xf32>
    %c0_12 = arith.constant 0 : index
    %c0_13 = arith.constant 0 : index
    %c0_14 = arith.constant 0 : index
    %22 = vector.load %arg4[%c0_12, %c0_13, %c0_14] : memref<1x1x64xf32, #tpu.memory_space<vmem>>, vector<1x1x64xf32>
    %23 = vector.shape_cast %22 : vector<1x1x64xf32> to vector<1x64xf32>
    %24 = vector.broadcast %23 : vector<1x64xf32> to vector<8x64xf32>
    %25 = arith.mulf %21, %24 : vector<8x64xf32>
    %cst_15 = arith.constant dense<0.000000e+00> : vector<8xf32>
    %26 = vector.multi_reduction <add>, %25, %cst_15 [1] : vector<8x64xf32> to vector<8xf32>
    %27 = vector.shape_cast %26 : vector<8xf32> to vector<8x1xf32>
    %28 = arith.addf %1, %27 : vector<8x1xf32>
    %c0_16 = arith.constant 0 : index
    %29 = memref.load %arg5[%c0_16] : memref<1xf32, #tpu.memory_space<smem>>
    %30 = vector.broadcast %29 : f32 to vector<8x1xf32>
    %31 = arith.addf %28, %30 : vector<8x1xf32>
    %32 = arith.negf %31 : vector<8x1xf32>
    %33 = math.exp %32 : vector<8x1xf32>
    %cst_17 = arith.constant 1.000000e+00 : f32
    %34 = vector.broadcast %cst_17 : f32 to vector<8x1xf32>
    %35 = arith.addf %34, %33 : vector<8x1xf32>
    %36 = arith.divf %34, %35 : vector<8x1xf32>
    %c0_18 = arith.constant 0 : index
    %c0_19 = arith.constant 0 : index
    %37 = vector.load %arg6[%c0_18, %c0_19] : memref<8x1xf32, #tpu.memory_space<vmem>>, vector<8x1xf32>
    tpu.vector_store %arg6[%c0_18, %c0_19], %36 {strides = array<i32>} : memref<8x1xf32, #tpu.memory_space<vmem>>, vector<8x1xf32>,
    return
  }
  func.func @transform_0(%arg0: i32) -> (i32, i32) {
    %c0_i32 = arith.constant 0 : i32
    %c0_i32_0 = arith.constant 0 : i32
    return %arg0, %c0_i32 : i32, i32
  }
  func.func @transform_1(%arg0: i32) -> (i32, i32, i32) {
    %c0_i32 = arith.constant 0 : i32
    %c0_i32_0 = arith.constant 0 : i32
    %c0_i32_1 = arith.constant 0 : i32
    %c0_i32_2 = arith.constant 0 : i32
    return %c0_i32, %c0_i32_0, %c0_i32_1 : i32, i32, i32
  }
  func.func @transform_2(%arg0: i32) -> (i32, i32, i32) {
    %c0_i32 = arith.constant 0 : i32
    %c0_i32_0 = arith.constant 0 : i32
    %c0_i32_1 = arith.constant 0 : i32
    %c0_i32_2 = arith.constant 0 : i32
    return %c0_i32, %c0_i32_0, %c0_i32_1 : i32, i32, i32
  }
  func.func @transform_3(%arg0: i32) -> (i32, i32, i32) {
    %c0_i32 = arith.constant 0 : i32
    %c0_i32_0 = arith.constant 0 : i32
    %c0_i32_1 = arith.constant 0 : i32
    %c0_i32_2 = arith.constant 0 : i32
    return %c0_i32, %c0_i32_0, %c0_i32_1 : i32, i32, i32
  }
  func.func @transform_4(%arg0: i32) -> i32 {
    %c0_i32 = arith.constant 0 : i32
    %c0_i32_0 = arith.constant 0 : i32
    return %c0_i32 : i32
  }
  func.func @transform_5(%arg0: i32) -> (i32, i32) {
    %c0_i32 = arith.constant 0 : i32
    %c0_i32_0 = arith.constant 0 : i32
    return %arg0, %c0_i32 : i32, i32
  }
}

</mosaic_0001>

<llo_original>
// kernel: tpu_custom_call.1
$region0: #{tpu_custom_call.1}
  #allocation0 [shape = 'u32[]', space=smem, size = 0x4, offset = 0x4, fixed_abs, tag = 'smem constant byte address 0x4 - core index']
  #allocation1 [shape = 'u32[72,128]{1,0:T(1,128)}', space=vmem, size = 0x9000, scoped, tag = 'internal scratch']
  #allocation2 [shape = 'f32[1]{0:T(128)S(6)}', space=smem, size = 0x200, scoped, tag = 'scoped memory for tpu_custom_call.1']
  %s0 = inlined_call_operand.hbm [shape: bf16[16,32], index: 0, kind: input, shape index: {}]
  %s1 = inlined_call_operand.hbm [shape: bf16[1,32,64], index: 1, kind: input, shape index: {}]
  %s2 = inlined_call_operand.vmem [shape: f32[1,1,64], index: 2, kind: input, shape index: {}]
  %s3 = inlined_call_operand.vmem [shape: f32[1,1,64], index: 3, kind: input, shape index: {}]
  %s4 = inlined_call_operand.<no memory space> [shape: f32[1], index: 4, kind: input, shape index: {}]
  %s5 = inlined_call_operand.vmem [shape: f32[16,1], index: 5, kind: output, shape index: {}]
  %s6 = sld [smem:[#allocation0]]
  $region61: #{tpu_custom_call.1} parent=0
    _
  %s8 = ssub.s32 1, %s6
  %s9 = scalar_select 0, %s8, %s6
  %10 = sst [smem:[#allocation2]] %s4
  $region1: #{tpu_custom_call.1} parent=0
    #allocation3 [shape = 'u8[4096]{0}', space=vmem, size = 0x1000, scoped, tag = 'input window, operand 0']
    #allocation4 [shape = 's32[2]{0}', space=sflag, size = 0x8, scoped, tag = 'scoped memory for tpu_custom_call.1']
    #allocation5 [shape = 'u8[8192]{0}', space=vmem, size = 0x2000, scoped, tag = 'input window, operand 1, single buffered']
    #allocation6 [shape = 's32[1]{0}', space=sflag, size = 0x4, scoped, tag = 'scoped memory for tpu_custom_call.1']
    %11 = vsyncpa [#allocation4], 0
    %s12 = scalar_lea.sflag [#allocation4], 1
    %13 = vsyncpa %s12, 0
    %14 = vsyncpa [#allocation6], 0
    loop: start=0, step=1, limit=4
    $region2: #{tpu_custom_call.1} parent=1 // loop_pre_header
      _
    $region3: #{tpu_custom_call.1} parent=1 // loop_header
      %s16 = sphi 0, %s20
      %p17 = scmp.ge.s32.totalorder %s16, 4
      %s26 = sphi 0, %s28
      %s29 = sphi 0, %s26
      %s30 = sphi 0, %s29
      %s46 = sphi 0, %s30
      %s50 = sphi 0, %s50
      %s52 = sphi 0, %s50
      %s53 = sphi 0, %s52
      %s67 = sphi 0, %s53
      %s71 = sphi 0, %s71
      %s73 = sphi 0, %s71
      %s74 = sphi 0, %s73
      %s88 = sphi 0, %s74
      %s92 = sphi 0, %s92
      %s94 = sphi 0, %s92
      %s95 = sphi 0, %s94
      %s109 = sphi 0, %s95
      %s113 = sphi 0, %s113
      %s115 = sphi 0, %s113
      %s116 = sphi 0, %s115
      %s130 = sphi 0, %s116
      %s136 = sphi 0, %s138
      %s139 = sphi 0, %s136
      %s140 = sphi 0, %s139
      %s156 = sphi 0, %s140
    $region4: #{tpu_custom_call.1} parent=1 // loop_header_branch
      %19 = sbr.rel (%p17) target = $region8
    $region5: #{tpu_custom_call.1} parent=1 // loop_body
      %s21 = ssub.s32 %s16, 1
      %s22 = ssub.s32 %s16, 2
      %s23 = sadd.s32 %s16, 1
      %s24 = ssub.s32 %s16, %s23
      %p25 = scmp.eq.s32.totalorder %s24, 0
      %s27 = sadd.s32 %s26, 1
      %s28 = scalar_select %p25, %s26, %s27
      %p31 = pneg %p25
      %p32 = scmp.eq.s32.totalorder %s16, 1
      %p33 = por %p31, %p32
      %p34 = scmp.ne.s32.totalorder %s26, %s29
      %p35 = scmp.eq.s32.totalorder %s16, 0
      %p36 = por %p34, %p35
      %p37 = scmp.ne.s32.totalorder %s26, %s29
      %p38 = scmp.eq.s32.totalorder %s21, 1
      %p39 = por %p37, %p38
      %p40 = scmp.ne.s32.totalorder %s29, %s30
      %p41 = scmp.eq.s32.totalorder %s21, 0
      %p42 = por %p40, %p41
      %p43 = scmp.ne.s32.totalorder %s29, %s30
      %p44 = scmp.eq.s32.totalorder %s22, 1
      %p45 = por %p43, %p44
      %p47 = scmp.ne.s32.totalorder %s30, %s46
      %p48 = scmp.eq.s32.totalorder %s22, 0
      %p49 = por %p47, %p48
      %s51 = sadd.s32 %s50, 1
      %p54 = scmp.eq.s32.totalorder %s16, 1
      %p55 = scmp.ne.s32.totalorder %s50, %s52
      %p56 = scmp.eq.s32.totalorder %s16, 0
      %p57 = por %p55, %p56
      %p58 = scmp.ne.s32.totalorder %s50, %s52
      %p59 = scmp.eq.s32.totalorder %s21, 1
      %p60 = por %p58, %p59
      %p61 = scmp.ne.s32.totalorder %s52, %s53
      %p62 = scmp.eq.s32.totalorder %s21, 0
      %p63 = por %p61, %p62
      %p64 = scmp.ne.s32.totalorder %s52, %s53
      %p65 = scmp.eq.s32.totalorder %s22, 1
      %p66 = por %p64, %p65
      %p68 = scmp.ne.s32.totalorder %s53, %s67
      %p69 = scmp.eq.s32.totalorder %s22, 0
      %p70 = por %p68, %p69
      %s72 = sadd.s32 %s71, 1
      %p75 = scmp.eq.s32.totalorder %s16, 1
      %p76 = scmp.ne.s32.totalorder %s71, %s73
      %p77 = scmp.eq.s32.totalorder %s16, 0
      %p78 = por %p76, %p77
      %p79 = scmp.ne.s32.totalorder %s71, %s73
      %p80 = scmp.eq.s32.totalorder %s21, 1
      %p81 = por %p79, %p80
      %p82 = scmp.ne.s32.totalorder %s73, %s74
      %p83 = scmp.eq.s32.totalorder %s21, 0
      %p84 = por %p82, %p83
      %p85 = scmp.ne.s32.totalorder %s73, %s74
      %p86 = scmp.eq.s32.totalorder %s22, 1
      %p87 = por %p85, %p86
      %p89 = scmp.ne.s32.totalorder %s74, %s88
      %p90 = scmp.eq.s32.totalorder %s22, 0
      %p91 = por %p89, %p90
      %s93 = sadd.s32 %s92, 1
      %p96 = scmp.eq.s32.totalorder %s16, 1
      %p97 = scmp.ne.s32.totalorder %s92, %s94
      %p98 = scmp.eq.s32.totalorder %s16, 0
      %p99 = por %p97, %p98
      %p100 = scmp.ne.s32.totalorder %s92, %s94
      %p101 = scmp.eq.s32.totalorder %s21, 1
      %p102 = por %p100, %p101
      %p103 = scmp.ne.s32.totalorder %s94, %s95
      %p104 = scmp.eq.s32.totalorder %s21, 0
      %p105 = por %p103, %p104
      %p106 = scmp.ne.s32.totalorder %s94, %s95
      %p107 = scmp.eq.s32.totalorder %s22, 1
      %p108 = por %p106, %p107
      %p110 = scmp.ne.s32.totalorder %s95, %s109
      %p111 = scmp.eq.s32.totalorder %s22, 0
      %p112 = por %p110, %p111
      %s114 = sadd.s32 %s113, 1
      %p117 = scmp.eq.s32.totalorder %s16, 1
      %p118 = scmp.ne.s32.totalorder %s113, %s115
      %p119 = scmp.eq.s32.totalorder %s16, 0
      %p120 = por %p118, %p119
      %p121 = scmp.ne.s32.totalorder %s113, %s115
      %p122 = scmp.eq.s32.totalorder %s21, 1
      %p123 = por %p121, %p122
      %p124 = scmp.ne.s32.totalorder %s115, %s116
      %p125 = scmp.eq.s32.totalorder %s21, 0
      %p126 = por %p124, %p125
      %p127 = scmp.ne.s32.totalorder %s115, %s116
      %p128 = scmp.eq.s32.totalorder %s22, 1
      %p129 = por %p127, %p128
      %p131 = scmp.ne.s32.totalorder %s116, %s130
      %p132 = scmp.eq.s32.totalorder %s22, 0
      %p133 = por %p131, %p132
      %s134 = ssub.s32 %s16, %s23
      %p135 = scmp.eq.s32.totalorder %s134, 0
      %s137 = sadd.s32 %s136, 1
      %s138 = scalar_select %p135, %s136, %s137
      %p141 = pneg %p135
      %p142 = scmp.eq.s32.totalorder %s16, 1
      %p143 = por %p141, %p142
      %p144 = scmp.ne.s32.totalorder %s136, %s139
      %p145 = scmp.eq.s32.totalorder %s16, 0
      %p146 = por %p144, %p145
      %p147 = scmp.ne.s32.totalorder %s136, %s139
      %p148 = scmp.eq.s32.totalorder %s21, 1
      %p149 = por %p147, %p148
      %p150 = scmp.ne.s32.totalorder %s139, %s140
      %p151 = scmp.eq.s32.totalorder %s21, 0
      %p152 = por %p150, %p151
      %p153 = scmp.ne.s32.totalorder %s139, %s140
      %p154 = scmp.eq.s32.totalorder %s22, 1
      %p155 = por %p153, %p154
      %p157 = scmp.ne.s32.totalorder %s140, %s156
      %p158 = scmp.eq.s32.totalorder %s22, 0
      %p159 = por %p157, %p158
      %p160 = scmp.le.s32.totalorder 1, %s16
      %p161 = scmp.lt.s32.totalorder %s16, 3
      %p162 = pnand %p160, %p161
      %p163 = pneg %p162
      // Predicated region
      $region9: #{tpu_custom_call.1} parent=5 // pred_check
        _
      $region10: #{tpu_custom_call.1} parent=5 // pred_check_branch
        %165 = sbr.rel (%p162) target = $region12
      $region11: #{tpu_custom_call.1} parent=5 // pred_region
        %s166 = ssub.s32 %s16, 1
        // Predicated region
        $region13: #{tpu_custom_call.1} parent=11 // pred_check
          %p167 = pneg %p63
        $region14: #{tpu_custom_call.1} parent=11 // pred_check_branch
          %169 = sbr.rel (%p167) target = $region16
        $region15: #{tpu_custom_call.1} parent=11 // pred_region
          %171 = vsyncadd [#allocation6], 0
          %s172 = sshll.u32 %s1, 4
          %s173 = int_to_ptr.hbm [resolvable:$true] %s172
          %s174 = sshll.u32 [#allocation5], 4
          %s175 = int_to_ptr.vmem [resolvable:$true] %s174
          %180 = dma.hbm_to_vmem [thread:$0]  %s173, 256, %s175, [#allocation6], 64, 64, 4
        $region16: #{tpu_custom_call.1} parent=11 // pred_fallthru
          _
        // Predicated region
        $region17: #{tpu_custom_call.1} parent=11 // pred_check
          %p181 = pneg %p84
        $region18: #{tpu_custom_call.1} parent=11 // pred_check_branch
          %183 = sbr.rel (%p181) target = $region20
        $region19: #{tpu_custom_call.1} parent=11 // pred_region
          _
        $region20: #{tpu_custom_call.1} parent=11 // pred_fallthru
          _
        // Predicated region
        $region21: #{tpu_custom_call.1} parent=11 // pred_check
          %p184 = pneg %p105
        $region22: #{tpu_custom_call.1} parent=11 // pred_check_branch
          %186 = sbr.rel (%p184) target = $region24
        $region23: #{tpu_custom_call.1} parent=11 // pred_region
          _
        $region24: #{tpu_custom_call.1} parent=11 // pred_fallthru
          _
        // Predicated region
        $region25: #{tpu_custom_call.1} parent=11 // pred_check
          %p187 = pneg %p126
        $region26: #{tpu_custom_call.1} parent=11 // pred_check_branch
          %189 = sbr.rel (%p187) target = $region28
        $region27: #{tpu_custom_call.1} parent=11 // pred_region
          _
        $region28: #{tpu_custom_call.1} parent=11 // pred_fallthru
          _
      $region12: #{tpu_custom_call.1} parent=5 // pred_fallthru
        _
      %p190 = scmp.lt.s32.totalorder %s16, 2
      // Predicated region
      $region29: #{tpu_custom_call.1} parent=5 // pred_check
        %p191 = pneg %p190
      $region30: #{tpu_custom_call.1} parent=5 // pred_check_branch
        %193 = sbr.rel (%p191) target = $region32
      $region31: #{tpu_custom_call.1} parent=5 // pred_region
        // Predicated region
        $region33: #{tpu_custom_call.1} parent=31 // pred_check
          %p194 = pneg %p36
        $region34: #{tpu_custom_call.1} parent=31 // pred_check_branch
          %196 = sbr.rel (%p194) target = $region36
        $region35: #{tpu_custom_call.1} parent=31 // pred_region
          %s197 = sand.u32 %s26, 1
          %s198 = scalar_lea.sflag [#allocation4], %s197
          %s199 = sand.u32 %s26, 1
          %s200 = smul.addr %s199, 4
          %s201 = scalar_lea.vmem [#allocation3], %s200
          %203 = vsyncadd %s198, 0
          %s204 = smul.addr %s16, 4
          %s205 = scalar_lea.hbm %s0, %s204
          %s207 = sshll.u32 %s205, 4
          %s208 = int_to_ptr.hbm [resolvable:$true] %s207
          %s209 = sshll.u32 %s201, 4
          %s210 = int_to_ptr.vmem [resolvable:$true] %s209
          %212 = dma.hbm_to_vmem [thread:$0]  %s208, 64, %s210, %s198
        $region36: #{tpu_custom_call.1} parent=31 // pred_fallthru
          _
      $region32: #{tpu_custom_call.1} parent=5 // pred_fallthru
        _
      %p213 = scmp.le.s32.totalorder 1, %s16
      %p214 = scmp.lt.s32.totalorder %s16, 3
      %p215 = pnand %p213, %p214
      %p216 = pneg %p215
      // Predicated region
      $region37: #{tpu_custom_call.1} parent=5 // pred_check
        _
      $region38: #{tpu_custom_call.1} parent=5 // pred_check_branch
        %218 = sbr.rel (%p215) target = $region40
      $region39: #{tpu_custom_call.1} parent=5 // pred_region
        %s219 = ssub.s32 %s16, 1
        %s220 = sand.u32 %s29, 1
        %s221 = scalar_lea.sflag [#allocation4], %s220
        %s222 = sand.u32 %s29, 1
        %s223 = smul.addr %s222, 4
        %s224 = scalar_lea.vmem [#allocation3], %s223
        // Predicated region
        $region41: #{tpu_custom_call.1} parent=39 // pred_check
          %p225 = pneg %p42
        $region42: #{tpu_custom_call.1} parent=39 // pred_check_branch
          %227 = sbr.rel (%p225) target = $region44
        $region43: #{tpu_custom_call.1} parent=39 // pred_region
          %229 = dma.done %s221, 64
        $region44: #{tpu_custom_call.1} parent=39 // pred_fallthru
          _
        // Predicated region
        $region45: #{tpu_custom_call.1} parent=39 // pred_check
          %p230 = pneg %p63
        $region46: #{tpu_custom_call.1} parent=39 // pred_check_branch
          %232 = sbr.rel (%p230) target = $region48
        $region47: #{tpu_custom_call.1} parent=39 // pred_region
          %234 = dma.done [#allocation6], 256
        $region48: #{tpu_custom_call.1} parent=39 // pred_fallthru
          _
        %s235 = sand.u32 %s29, 1
        %s236 = scalar_lea.sflag [#allocation4], %s235
        %s237 = sand.u32 %s29, 1
        %s238 = smul.addr %s237, 4
        %s239 = scalar_lea.vmem [#allocation3], %s238
        %p240 = pneg %p42
        %p241 = pneg %p39
        %p242 = pneg %p63
        %p243 = pneg %p60
        %p244 = pneg %p84
        %p245 = pneg %p81
        %p246 = pneg %p105
        %p247 = pneg %p102
        %p248 = pneg %p126
        %p249 = pneg %p123
        %p250 = pneg %p152
        %p251 = pneg %p149
        %p252 = scmp.lt.s32.totalorder %s21, 1
        %s253 = scalar_select %p252, %s21, 1
        %s254 = smul.addr %s253, 8
        %s255 = scalar_lea.vmem %s5, %s254
        %p256 = scmp.lt.s32.totalorder %s21, 1
        %s257 = scalar_select %p256, %s21, 1
        %s258 = smul.addr %s257, 8
        %s259 = scalar_lea.vmem %s5, %s258
        %v261 = vld [vmem:[%s224] sm:$0xf]
        %v262 = vld [vmem:[#allocation5] sm:$0xf]
        %v263 = vld [vmem:[#allocation5 + $0x4] sm:$0xf]
        %v264 = vld [vmem:[#allocation5 + $0x8] sm:$0xf]
        %v265 = vld [vmem:[#allocation5 + $0xc] sm:$0xf]
        %v266 = vld [vmem:[%s2] sm:$0x1]
        %v268 = vperm.slane %v266, 0
        %v274 = vunpack.c.l.b16 %v262
        %v275 = vunpack.c.l.b16 %v263
        %v276 = vunpack.c.l.b16 %v264
        %v277 = vunpack.c.l.b16 %v265
        %v278 = vpack.c.b16 %v275, %v274
        %v279 = vpack.c.b16 %v277, %v276
        %vm282 = vcmask 261120
        %v284 = vsel %vm282, %v261, 0
        %286 = vmatpush.bf16.msra.mxu0 0
        %287 = vmatpush.bf16.msra.mxu0 0
        %288 = vmatpush.bf16.msra.mxu0 0
        %289 = vmatpush.bf16.msra.mxu0 0
        %290 = vmatpush.bf16.msra.mxu0 0
        %291 = vmatpush.bf16.msra.mxu0 0
        %292 = vmatpush.bf16.msra.mxu0 %v279
        %293 = vmatpush.bf16.msra.mxu0 %v278
        %294 = vmatmul.bf16.gmra.mxu0 %v284
        %v295 = vpop.f32.mrf.mxu0
        %v296 = vadd.f32 %v268, %v295
        %v297 = vpop.f32.mrf.mxu0
        %298 = vdwg.mxu0
        %v299 = vmul.f32 %v296, %v296
        %v300 = vmul.f32 %v296, %v299
        %v301 = vmul.f32 %v300, 0.044715
        %v302 = vadd.f32 %v296, %v301
        %v303 = vmul.f32 %v302, 0.7978846
        %v304 = vtanh.pop %v303
        %v305 = vadd.f32 %v304, 1.0
        %v306 = vmul.f32 %v305, 0.5
        %v307 = vmul.f32 %v296, %v306
        %v308 = vld [vmem:[%s3] sm:$0x1]
        %v310 = vperm.slane %v308, 0
        %v312 = vmul.f32 %v307, %v310
        %vm313 = vcmask 523264
        %v314 = vsel %vm313, %v312, 0.0
        %315 = vadd.xlane.f32.xlu0 %v314
        %v316 = vpop.xlane.xlu0 %315
        %v317 = vadd.f32 %v316, 0.0
        %s318 = sld [smem:[#allocation2]]
        %v319 = vstv %s318
        %v320 = vadd.f32 %v317, %v319
        %v321 = vxor.u32 %v320, 2147483648
        %v322 = vmul.f32 %v321, 1.442695
        %v323 = vpow.pop %v322
        %v324 = vadd.f32 %v323, 1.0
        %v325 = vrcp.pop %v324
        %v326 = vmul.f32 %v324, %v325
        %v327 = vsub.f32 1.0, %v326
        %v328 = vmul.f32 %v325, %v327
        %v329 = vadd.f32 %v325, %v328
        %vm330 = vweird.f32 %v324
        %vm331 = vweird.f32 %v325
        %vm332 = vmor %vm330, %vm331
        %v333 = vsel %vm332, %v325, %v329
        %v334 = vand.u32 2147483647, %v324
        %vm335 = vcmp.eq.f32.partialorder %v334, 8.507059e+37
        %v336 = vand.u32 %v324, 2147483648
        %v337 = vor.u32 1.1754944e-38, %v336
        %v338 = vsel %vm335, %v337, %v333
        %v339 = vmul.f32 1.0, %v338
        %vm340 = vcmask 7168
        %341 = vst.msk [vmem:[%s259] sm:$0xff] %vm340, %v339
        %p342 = scmp.lt.s32.totalorder %s21, 1
        %s343 = scalar_select %p342, %s21, 1
        %s344 = smul.addr %s343, 8
        %s345 = scalar_lea.vmem %s5, %s344
        // Predicated region
        $region49: #{tpu_custom_call.1} parent=39 // pred_check
          %p346 = pneg %p149
        $region50: #{tpu_custom_call.1} parent=39 // pred_check_branch
          %348 = sbr.rel (%p346) target = $region52
        $region51: #{tpu_custom_call.1} parent=39 // pred_region
          _
        $region52: #{tpu_custom_call.1} parent=39 // pred_fallthru
          _
      $region40: #{tpu_custom_call.1} parent=5 // pred_fallthru
        _
      %p349 = scmp.le.s32.totalorder 2, %s16
      // Predicated region
      $region53: #{tpu_custom_call.1} parent=5 // pred_check
        %p350 = pneg %p349
      $region54: #{tpu_custom_call.1} parent=5 // pred_check_branch
        %352 = sbr.rel (%p350) target = $region56
      $region55: #{tpu_custom_call.1} parent=5 // pred_region
        %s353 = ssub.s32 %s16, 2
        // Predicated region
        $region57: #{tpu_custom_call.1} parent=55 // pred_check
          %p354 = pneg %p155
        $region58: #{tpu_custom_call.1} parent=55 // pred_check_branch
          %356 = sbr.rel (%p354) target = $region60
        $region59: #{tpu_custom_call.1} parent=55 // pred_region
          %p357 = scmp.lt.s32.totalorder %s22, 1
          %s358 = scalar_select %p357, %s22, 1
          %s359 = smul.addr %s358, 8
          %s360 = scalar_lea.vmem %s5, %s359
        $region60: #{tpu_custom_call.1} parent=55 // pred_fallthru
          _
      $region56: #{tpu_custom_call.1} parent=5 // pred_fallthru
        _
    $region6: #{tpu_custom_call.1} parent=1 // loop_footer
      %s20 = sadd.s32 1, %s16
    $region7: #{tpu_custom_call.1} parent=1 // loop_footer_branch
      %15 = sbr.rel target = $region3
    $region8: #{tpu_custom_call.1} parent=1 // loop_exit
      _
    %361 = vsyncpa [#allocation4], 1
    %s362 = scalar_lea.sflag [#allocation4], 1
    %363 = vsyncpa %s362, 1
    %364 = vsyncpa [#allocation6], 1

</llo_original>
